<compile_context>
chip_gen: v7x
topology: tpu7x:2x2x1
jax: 0.10.0
libtpu: 0.0.40
codegen_flags: <defaults>
</compile_context>

<pallas_src>
import functools

import jax
import jax.numpy as jnp
from jax import lax
from jax.experimental import pallas as pl
from jax.experimental.pallas import tpu as pltpu


def nn2_kernel(x_ref, w1_ref, b1_ref, w2_ref, b2_ref, o_ref, *, compute_dtype):
    # x_ref: [TB, IN] batch-major tile.  The transpose is folded into the MXU
    # contraction below (contract IN on both operands), so batch lands on lanes.
    x_tile = x_ref[...].astype(compute_dtype)        # in-kernel cast: no HBM pass
    w1 = w1_ref[...].astype(compute_dtype)
    # hT[H, TB] = W1[H, IN] . x[TB, IN]^T, f32 accumulation on the MXU.
    h = lax.dot_general(
        w1, x_tile,
        dimension_numbers=(((1,), (1,)), ((), ())),
        preferred_element_type=jnp.float32)
    h = h + b1_ref[...]                              # [H, 1] broadcasts across lanes
    # F.leaky_relu_ with default negative_slope=0.01.
    # (the preceding torch.relu(linear1(x)) in the reference forward is dead code)
    h = jnp.where(h >= 0, h, 0.01 * h)
    # Layer 2 (output width 1): VPU multiply + XLU sublane reduce, not a
    # 1-lane-wide MXU matmul.
    z = jnp.sum(h * w2_ref[...], axis=0, keepdims=True) + b2_ref[0]   # [1, TB]
    # Sigmoid: exp rides the EUP; exact divide keeps f32 fidelity.
    o_ref[...] = (1.0 / (1.0 + jnp.exp(-z))).astype(o_ref.dtype)


def _choose_block_b(b_pad, *, target_block_b=8192, min_grid=2):
    """Largest batch tile that is a multiple of 128, divides b_pad, is <= target
    (v7x VMEM-safe for the lane-padded [block_b, IN] tile), and keeps at least
    `min_grid` grid steps so the 'parallel' axis can shard across TensorCores."""
    m = b_pad // 128
    best = 128
    for d in range(1, m + 1):
        if m % d:
            continue
        bb = 128 * d
        if bb > target_block_b:
            break
        if (m // d) >= min_grid or m < min_grid:
            best = bb
    return best


def nn2_forward(x, w1, b1, w2, b2, *, block_b=None, compute_dtype=jnp.float32):
    """PyTorch-equivalent interface.

    x : [B, IN] batch-major input (read once from HBM; no wrapper transpose)
    w1: [H, IN]  (PyTorch nn.Linear weight layout for linear1)
    b1: [H]
    w2: [1, H]   (PyTorch weight layout for linear2)
    b2: [1]
    Returns [B, 1] float32 sigmoid outputs.
    """
    B, IN = x.shape
    H = w1.shape[0]

    # Pad only to the 128-lane granularity (<= 127 rows); no pad if B % 128 == 0.
    b_pad = pl.cdiv(B, 128) * 128
    if b_pad != B:
        x = jnp.pad(x, ((0, b_pad - B), (0, 0)))
    if block_b is None:
        block_b = _choose_block_b(b_pad)
    assert block_b % 128 == 0 and b_pad % block_b == 0

    b1_c = b1.reshape(H, 1).astype(jnp.float32)      # column -> broadcast over lanes
    w2_c = w2.reshape(H, 1).astype(jnp.float32)      # column for the sublane reduce
    b2_c = b2.reshape(1).astype(jnp.float32)         # single scalar -> SMEM

    grid = (b_pad // block_b,)
    cost = pl.CostEstimate(
        flops=2 * b_pad * IN * H + 3 * b_pad * H,
        transcendentals=b_pad,
        bytes_accessed=b_pad * IN * x.dtype.itemsize + b_pad * 4
                       + (H * IN + 2 * H + 1) * 4,
    )

    out_row = pl.pallas_call(
        functools.partial(nn2_kernel, compute_dtype=compute_dtype),
        out_shape=jax.ShapeDtypeStruct((1, b_pad), jnp.float32),
        grid=grid,
        in_specs=[
            pl.BlockSpec((block_b, IN), lambda i: (i, 0)),        # x batch tile (batch-major)
            pl.BlockSpec((H, IN), lambda i: (0, 0)),              # W1 (VMEM-resident)
            pl.BlockSpec((H, 1), lambda i: (0, 0)),               # b1 (VMEM-resident)
            pl.BlockSpec((H, 1), lambda i: (0, 0)),               # w2 (VMEM-resident)
            pl.BlockSpec(memory_space=pltpu.MemorySpace.SMEM),    # b2 scalar in SMEM
        ],
        out_specs=pl.BlockSpec((1, block_b), lambda i: (0, i)),   # lane-dense output row
        compiler_params=pltpu.CompilerParams(
            dimension_semantics=("parallel",),   # shard batch tiles across TensorCores
        ),
        cost_estimate=cost,
    )(x, w1, b1_c, w2_c, b2_c)
    return out_row[0, :B].reshape(B, 1)


def init_params(key, in_, out_):
    """nn.Linear default init: U(-1/sqrt(fan_in), +1/sqrt(fan_in)), PyTorch layouts."""
    k1, k2, k3, k4 = jax.random.split(key, 4)
    bound1 = 1.0 / (in_ ** 0.5)
    bound2 = 1.0 / (out_ ** 0.5)
    w1 = jax.random.uniform(k1, (out_, in_), jnp.float32, -bound1, bound1)   # [H, IN]
    b1 = jax.random.uniform(k2, (out_,), jnp.float32, -bound1, bound1)       # [H]
    w2 = jax.random.uniform(k3, (1, out_), jnp.float32, -bound2, bound2)     # [1, H]
    b2 = jax.random.uniform(k4, (1,), jnp.float32, -bound2, bound2)          # [1]
    return w1, b1, w2, b2


def nn2_reference(x, w1, b1, w2, b2, compute_dtype=jnp.float32):
    """Pure-JAX reference with the same math / dtypes as the kernel path."""
    h = jnp.dot(x.astype(compute_dtype), w1.T.astype(compute_dtype),
                preferred_element_type=jnp.float32) + b1[None, :]
    h = jnp.where(h >= 0, h, 0.01 * h)
    z = jnp.dot(h, w2.T) + b2[None, :]
    return 1.0 / (1.0 + jnp.exp(-z))


if __name__ == "__main__":
    key = jax.random.PRNGKey(0)
    kx, kp = jax.random.split(key)

    # Small model dims; B=500 exercises the (<=127-row) pad path and a 2-step grid.
    B, IN, H = 500, 16, 32
    x = jax.random.normal(kx, (B, IN), jnp.float32)
    w1, b1, w2, b2 = init_params(kp, IN, H)

    fwd = jax.jit(nn2_forward, static_argnames=("block_b", "compute_dtype"))

    # f32 path: faithful to the PyTorch module numerics.
    out_f32 = jax.block_until_ready(fwd(x, w1, b1, w2, b2))
    ref_f32 = nn2_reference(x, w1, b1, w2, b2)
    assert out_f32.shape == (B, 1)
    assert jnp.allclose(out_f32, ref_f32, atol=2e-5, rtol=2e-5)

    # bf16 MXU-operand path (cast happens inside the kernel; no extra HBM pass).
    out_bf16 = jax.block_until_ready(
        fwd(x, w1, b1, w2, b2, compute_dtype=jnp.bfloat16))
    ref_bf16 = nn2_reference(x, w1, b1, w2, b2, compute_dtype=jnp.bfloat16)
    assert jnp.allclose(out_bf16, ref_bf16, atol=2e-3, rtol=2e-3)

    print("KERNEL_OK")
</pallas_src>

<mosaic_0001>
module attributes {stable_mosaic.version = 11 : i64} {
  func.func @nn2_kernel(%arg0: i32, %arg1: memref<256x16xf32, #tpu.memory_space<vmem>>, %arg2: memref<32x16xf32, #tpu.memory_space<vmem>>, %arg3: memref<32x1xf32, #tpu.memory_space<vmem>>, %arg4: memref<32x1xf32, #tpu.memory_space<vmem>>, %arg5: memref<1xf32, #tpu.memory_space<smem>>, %arg6: memref<1x256xf32, #tpu.memory_space<vmem>>) attributes {dimension_semantics = [#tpu.dimension_semantics<parallel>], iteration_bounds = array<i64: 2>, scalar_prefetch = 0 : i64, scratch_operands = 0 : i64, tpu.core_type = #tpu.core_type<tc>, window_params = [{transform_indices = @transform_0, window_bounds = array<i64: 256, 16>}, {pipeline_mode = #tpu.pipeline_mode<synchronous>, transform_indices = @transform_1, window_bounds = array<i64: 32, 16>}, {pipeline_mode = #tpu.pipeline_mode<synchronous>, transform_indices = @transform_2, window_bounds = array<i64: 32, 1>}, {pipeline_mode = #tpu.pipeline_mode<synchronous>, transform_indices = @transform_3, window_bounds = array<i64: 32, 1>}, {transform_indices = @transform_4, window_bounds = array<i64: 1>}, {transform_indices = @transform_5, window_bounds = array<i64: 1, 256>}]} {
    %c0 = arith.constant 0 : index
    %c0_0 = arith.constant 0 : index
    %0 = vector.load %arg1[%c0, %c0_0] : memref<256x16xf32, #tpu.memory_space<vmem>>, vector<256x16xf32>
    %c0_1 = arith.constant 0 : index
    %c0_2 = arith.constant 0 : index
    %1 = vector.load %arg2[%c0_1, %c0_2] : memref<32x16xf32, #tpu.memory_space<vmem>>, vector<32x16xf32>
    %cst = arith.constant dense<0.000000e+00> : vector<32x256xf32>
    %2 = tpu.matmul %1, %0, %cst {dimension_numbers = #tpu.dot_dimension_numbers<[1], [1], [0], [0], [0, 0, 1, 0], [], []>} : vector<32x16xf32>, vector<256x16xf32>, vector<32x256xf32> -> vector<32x256xf32>
    %c0_3 = arith.constant 0 : index
    %c0_4 = arith.constant 0 : index
    %3 = vector.load %arg3[%c0_3, %c0_4] : memref<32x1xf32, #tpu.memory_space<vmem>>, vector<32x1xf32>
    %4 = vector.broadcast %3 : vector<32x1xf32> to vector<32x256xf32>
    %5 = arith.addf %2, %4 : vector<32x256xf32>
    %cst_5 = arith.constant 0.000000e+00 : f32
    %6 = vector.broadcast %cst_5 : f32 to vector<32x256xf32>
    %7 = arith.cmpf oge, %5, %6 : vector<32x256xf32>
    %cst_6 = arith.constant 0.00999999977 : f32
    %8 = vector.broadcast %cst_6 : f32 to vector<32x256xf32>
    %9 = arith.mulf %8, %5 : vector<32x256xf32>
    %10 = arith.select %7, %5, %9 : vector<32x256xi1>, vector<32x256xf32>
    %c0_7 = arith.constant 0 : index
    %c0_8 = arith.constant 0 : index
    %11 = vector.load %arg4[%c0_7, %c0_8] : memref<32x1xf32, #tpu.memory_space<vmem>>, vector<32x1xf32>
    %12 = vector.broadcast %11 : vector<32x1xf32> to vector<32x256xf32>
    %13 = arith.mulf %10, %12 : vector<32x256xf32>
    %cst_9 = arith.constant dense<0.000000e+00> : vector<256xf32>
    %14 = vector.multi_reduction <add>, %13, %cst_9 [0] : vector<32x256xf32> to vector<256xf32>
    %15 = vector.shape_cast %14 : vector<256xf32> to vector<1x256xf32>
    %c0_10 = arith.constant 0 : index
    %16 = memref.load %arg5[%c0_10] : memref<1xf32, #tpu.memory_space<smem>>
    %17 = vector.broadcast %16 : f32 to vector<1x256xf32>
    %18 = arith.addf %15, %17 : vector<1x256xf32>
    %cst_11 = arith.constant 0.000000e+00 : f32
    %19 = vector.broadcast %cst_11 : f32 to vector<1x256xf32>
    %20 = arith.subf %19, %18 : vector<1x256xf32>
    %21 = math.exp %20 : vector<1x256xf32>
    %cst_12 = arith.constant 1.000000e+00 : f32
    %22 = vector.broadcast %cst_12 : f32 to vector<1x256xf32>
    %23 = arith.addf %22, %21 : vector<1x256xf32>
    %cst_13 = arith.constant 1.000000e+00 : f32
    %24 = vector.broadcast %cst_13 : f32 to vector<1x256xf32>
    %25 = arith.divf %24, %23 : vector<1x256xf32>
    %c0_14 = arith.constant 0 : index
    %c0_15 = arith.constant 0 : index
    %26 = vector.load %arg6[%c0_14, %c0_15] : memref<1x256xf32, #tpu.memory_space<vmem>>, vector<1x256xf32>
    tpu.vector_store %arg6[%c0_14, %c0_15], %25 {strides = array<i32>} : memref<1x256xf32, #tpu.memory_space<vmem>>, vector<1x256xf32>,
    return
  }
  func.func @transform_0(%arg0: i32) -> (i32, i32) {
    %c0_i32 = arith.constant 0 : i32
    %c0_i32_0 = arith.constant 0 : i32
    return %arg0, %c0_i32 : i32, i32
  }
  func.func @transform_1(%arg0: i32) -> (i32, i32) {
    %c0_i32 = arith.constant 0 : i32
    %c0_i32_0 = arith.constant 0 : i32
    %c0_i32_1 = arith.constant 0 : i32
    return %c0_i32, %c0_i32_0 : i32, i32
  }
  func.func @transform_2(%arg0: i32) -> (i32, i32) {
    %c0_i32 = arith.constant 0 : i32
    %c0_i32_0 = arith.constant 0 : i32
    %c0_i32_1 = arith.constant 0 : i32
    return %c0_i32, %c0_i32_0 : i32, i32
  }
  func.func @transform_3(%arg0: i32) -> (i32, i32) {
    %c0_i32 = arith.constant 0 : i32
    %c0_i32_0 = arith.constant 0 : i32
    %c0_i32_1 = arith.constant 0 : i32
    return %c0_i32, %c0_i32_0 : i32, i32
  }
  func.func @transform_4(%arg0: i32) -> i32 {
    %c0_i32 = arith.constant 0 : i32
    %c0_i32_0 = arith.constant 0 : i32
    return %c0_i32 : i32
  }
  func.func @transform_5(%arg0: i32) -> (i32, i32) {
    %c0_i32 = arith.constant 0 : i32
    %c0_i32_0 = arith.constant 0 : i32
    return %c0_i32, %arg0 : i32, i32
  }
}

</mosaic_0001>

<llo_original>
// kernel: nn2_forward.1
$region0: #{nn2_forward.1}
  #allocation0 [shape = 'u32[]', space=smem, size = 0x4, offset = 0x4, fixed_abs, tag = 'smem constant byte address 0x4 - core index']
  #allocation1 [shape = 'u32[144,128]{1,0:T(1,128)}', space=vmem, size = 0x12000, scoped, tag = 'internal scratch']
  #allocation2 [shape = 'f32[1]{0:T(128)S(6)}', space=smem, size = 0x200, scoped, tag = 'scoped memory for nn2_forward.1']
  %s0 = inlined_call_operand.vmem [shape: f32[512,16], index: 0, kind: input, shape index: {}]
  %s1 = inlined_call_operand.vmem [shape: f32[32,16], index: 1, kind: input, shape index: {}]
  %s2 = inlined_call_operand.vmem [shape: f32[32,1], index: 2, kind: input, shape index: {}]
  %s3 = inlined_call_operand.vmem [shape: f32[32,1], index: 3, kind: input, shape index: {}]
  %s4 = inlined_call_operand.<no memory space> [shape: f32[1], index: 4, kind: input, shape index: {}]
  %s5 = inlined_call_operand.vmem [shape: f32[1,512], index: 5, kind: output, shape index: {}]
  %s6 = sld [smem:[#allocation0]]
  $region53: #{nn2_forward.1} parent=0
    _
  %s8 = ssub.s32 1, %s6
  %s9 = scalar_select 0, %s8, %s6
  %10 = sst [smem:[#allocation2]] %s4
  loop: start=0, step=1, limit=4
  $region2: #{nn2_forward.1} parent=0 // loop_pre_header
    _
  $region3: #{nn2_forward.1} parent=0 // loop_header
    %s12 = sphi 0, %s16
    %p13 = scmp.ge.s32.totalorder %s12, 4
    %s22 = sphi 0, %s24
    %s25 = sphi 0, %s22
    %s26 = sphi 0, %s25
    %s42 = sphi 0, %s26
    %s46 = sphi 0, %s46
    %s48 = sphi 0, %s46
    %s49 = sphi 0, %s48
    %s63 = sphi 0, %s49
    %s67 = sphi 0, %s67
    %s69 = sphi 0, %s67
    %s70 = sphi 0, %s69
    %s84 = sphi 0, %s70
    %s88 = sphi 0, %s88
    %s90 = sphi 0, %s88
    %s91 = sphi 0, %s90
    %s105 = sphi 0, %s91
    %s109 = sphi 0, %s109
    %s111 = sphi 0, %s109
    %s112 = sphi 0, %s111
    %s126 = sphi 0, %s112
    %s132 = sphi 0, %s134
    %s135 = sphi 0, %s132
    %s136 = sphi 0, %s135
    %s152 = sphi 0, %s136
  $region4: #{nn2_forward.1} parent=0 // loop_header_branch
    %15 = sbr.rel (%p13) target = $region8
  $region5: #{nn2_forward.1} parent=0 // loop_body
    %s17 = ssub.s32 %s12, 1
    %s18 = ssub.s32 %s12, 2
    %s19 = sadd.s32 %s12, 1
    %s20 = ssub.s32 %s12, %s19
    %p21 = scmp.eq.s32.totalorder %s20, 0
    %s23 = sadd.s32 %s22, 1
    %s24 = scalar_select %p21, %s22, %s23
    %p27 = pneg %p21
    %p28 = scmp.eq.s32.totalorder %s12, 1
    %p29 = por %p27, %p28
    %p30 = scmp.ne.s32.totalorder %s22, %s25
    %p31 = scmp.eq.s32.totalorder %s12, 0
    %p32 = por %p30, %p31
    %p33 = scmp.ne.s32.totalorder %s22, %s25
    %p34 = scmp.eq.s32.totalorder %s17, 1
    %p35 = por %p33, %p34
    %p36 = scmp.ne.s32.totalorder %s25, %s26
    %p37 = scmp.eq.s32.totalorder %s17, 0
    %p38 = por %p36, %p37
    %p39 = scmp.ne.s32.totalorder %s25, %s26
    %p40 = scmp.eq.s32.totalorder %s18, 1
    %p41 = por %p39, %p40
    %p43 = scmp.ne.s32.totalorder %s26, %s42
    %p44 = scmp.eq.s32.totalorder %s18, 0
    %p45 = por %p43, %p44
    %s47 = sadd.s32 %s46, 1
    %p50 = scmp.eq.s32.totalorder %s12, 1
    %p51 = scmp.ne.s32.totalorder %s46, %s48
    %p52 = scmp.eq.s32.totalorder %s12, 0
    %p53 = por %p51, %p52
    %p54 = scmp.ne.s32.totalorder %s46, %s48
    %p55 = scmp.eq.s32.totalorder %s17, 1
    %p56 = por %p54, %p55
    %p57 = scmp.ne.s32.totalorder %s48, %s49
    %p58 = scmp.eq.s32.totalorder %s17, 0
    %p59 = por %p57, %p58
    %p60 = scmp.ne.s32.totalorder %s48, %s49
    %p61 = scmp.eq.s32.totalorder %s18, 1
    %p62 = por %p60, %p61
    %p64 = scmp.ne.s32.totalorder %s49, %s63
    %p65 = scmp.eq.s32.totalorder %s18, 0
    %p66 = por %p64, %p65
    %s68 = sadd.s32 %s67, 1
    %p71 = scmp.eq.s32.totalorder %s12, 1
    %p72 = scmp.ne.s32.totalorder %s67, %s69
    %p73 = scmp.eq.s32.totalorder %s12, 0
    %p74 = por %p72, %p73
    %p75 = scmp.ne.s32.totalorder %s67, %s69
    %p76 = scmp.eq.s32.totalorder %s17, 1
    %p77 = por %p75, %p76
    %p78 = scmp.ne.s32.totalorder %s69, %s70
    %p79 = scmp.eq.s32.totalorder %s17, 0
    %p80 = por %p78, %p79
    %p81 = scmp.ne.s32.totalorder %s69, %s70
    %p82 = scmp.eq.s32.totalorder %s18, 1
    %p83 = por %p81, %p82
    %p85 = scmp.ne.s32.totalorder %s70, %s84
    %p86 = scmp.eq.s32.totalorder %s18, 0
    %p87 = por %p85, %p86
    %s89 = sadd.s32 %s88, 1
    %p92 = scmp.eq.s32.totalorder %s12, 1
    %p93 = scmp.ne.s32.totalorder %s88, %s90
    %p94 = scmp.eq.s32.totalorder %s12, 0
    %p95 = por %p93, %p94
    %p96 = scmp.ne.s32.totalorder %s88, %s90
    %p97 = scmp.eq.s32.totalorder %s17, 1
    %p98 = por %p96, %p97
    %p99 = scmp.ne.s32.totalorder %s90, %s91
    %p100 = scmp.eq.s32.totalorder %s17, 0
    %p101 = por %p99, %p100
    %p102 = scmp.ne.s32.totalorder %s90, %s91
    %p103 = scmp.eq.s32.totalorder %s18, 1
    %p104 = por %p102, %p103
    %p106 = scmp.ne.s32.totalorder %s91, %s105
    %p107 = scmp.eq.s32.totalorder %s18, 0
    %p108 = por %p106, %p107
    %s110 = sadd.s32 %s109, 1
    %p113 = scmp.eq.s32.totalorder %s12, 1
    %p114 = scmp.ne.s32.totalorder %s109, %s111
    %p115 = scmp.eq.s32.totalorder %s12, 0
    %p116 = por %p114, %p115
    %p117 = scmp.ne.s32.totalorder %s109, %s111
    %p118 = scmp.eq.s32.totalorder %s17, 1
    %p119 = por %p117, %p118
    %p120 = scmp.ne.s32.totalorder %s111, %s112
    %p121 = scmp.eq.s32.totalorder %s17, 0
    %p122 = por %p120, %p121
    %p123 = scmp.ne.s32.totalorder %s111, %s112
    %p124 = scmp.eq.s32.totalorder %s18, 1
    %p125 = por %p123, %p124
    %p127 = scmp.ne.s32.totalorder %s112, %s126
    %p128 = scmp.eq.s32.totalorder %s18, 0
    %p129 = por %p127, %p128
    %s130 = ssub.s32 %s12, %s19
    %p131 = scmp.eq.s32.totalorder %s130, 0
    %s133 = sadd.s32 %s132, 1
    %s134 = scalar_select %p131, %s132, %s133
    %p137 = pneg %p131
    %p138 = scmp.eq.s32.totalorder %s12, 1
    %p139 = por %p137, %p138
    %p140 = scmp.ne.s32.totalorder %s132, %s135
    %p141 = scmp.eq.s32.totalorder %s12, 0
    %p142 = por %p140, %p141
    %p143 = scmp.ne.s32.totalorder %s132, %s135
    %p144 = scmp.eq.s32.totalorder %s17, 1
    %p145 = por %p143, %p144
    %p146 = scmp.ne.s32.totalorder %s135, %s136
    %p147 = scmp.eq.s32.totalorder %s17, 0
    %p148 = por %p146, %p147
    %p149 = scmp.ne.s32.totalorder %s135, %s136
    %p150 = scmp.eq.s32.totalorder %s18, 1
    %p151 = por %p149, %p150
    %p153 = scmp.ne.s32.totalorder %s136, %s152
    %p154 = scmp.eq.s32.totalorder %s18, 0
    %p155 = por %p153, %p154
    %p156 = scmp.le.s32.totalorder 1, %s12
    %p157 = scmp.lt.s32.totalorder %s12, 3
    %p158 = pnand %p156, %p157
    %p159 = pneg %p158
    // Predicated region
    $region9: #{nn2_forward.1} parent=5 // pred_check
      _
    $region10: #{nn2_forward.1} parent=5 // pred_check_branch
      %161 = sbr.rel (%p158) target = $region12
    $region11: #{nn2_forward.1} parent=5 // pred_region
      %s162 = ssub.s32 %s12, 1
      // Predicated region
      $region13: #{nn2_forward.1} parent=11 // pred_check
        %p163 = pneg %p59
      $region14: #{nn2_forward.1} parent=11 // pred_check_branch
        %165 = sbr.rel (%p163) target = $region16
      $region15: #{nn2_forward.1} parent=11 // pred_region
        _
      $region16: #{nn2_forward.1} parent=11 // pred_fallthru
        _
      // Predicated region
      $region17: #{nn2_forward.1} parent=11 // pred_check
        %p166 = pneg %p80
      $region18: #{nn2_forward.1} parent=11 // pred_check_branch
        %168 = sbr.rel (%p166) target = $region20
      $region19: #{nn2_forward.1} parent=11 // pred_region
        _
      $region20: #{nn2_forward.1} parent=11 // pred_fallthru
        _
      // Predicated region
      $region21: #{nn2_forward.1} parent=11 // pred_check
        %p169 = pneg %p101
      $region22: #{nn2_forward.1} parent=11 // pred_check_branch
        %171 = sbr.rel (%p169) target = $region24
      $region23: #{nn2_forward.1} parent=11 // pred_region
        _
      $region24: #{nn2_forward.1} parent=11 // pred_fallthru
        _
      // Predicated region
      $region25: #{nn2_forward.1} parent=11 // pred_check
        %p172 = pneg %p122
      $region26: #{nn2_forward.1} parent=11 // pred_check_branch
        %174 = sbr.rel (%p172) target = $region28
      $region27: #{nn2_forward.1} parent=11 // pred_region
        _
      $region28: #{nn2_forward.1} parent=11 // pred_fallthru
        _
    $region12: #{nn2_forward.1} parent=5 // pred_fallthru
      _
    %p175 = scmp.lt.s32.totalorder %s12, 2
    // Predicated region
    $region29: #{nn2_forward.1} parent=5 // pred_check
      %p176 = pneg %p175
    $region30: #{nn2_forward.1} parent=5 // pred_check_branch
      %178 = sbr.rel (%p176) target = $region32
    $region31: #{nn2_forward.1} parent=5 // pred_region
      // Predicated region
      $region33: #{nn2_forward.1} parent=31 // pred_check
        %p179 = pneg %p32
      $region34: #{nn2_forward.1} parent=31 // pred_check_branch
        %181 = sbr.rel (%p179) target = $region36
      $region35: #{nn2_forward.1} parent=31 // pred_region
        %s182 = smul.u32 32, %s12
        %p183 = scmp.lt.s32.totalorder %s182, 63
        %s184 = scalar_select %p183, %s182, 63
        %s185 = smul.addr %s184, 8
        %s186 = scalar_lea.vmem %s0, %s185
        %s187 = smul.u32 32, %s12
      $region36: #{nn2_forward.1} parent=31 // pred_fallthru
        _
    $region32: #{nn2_forward.1} parent=5 // pred_fallthru
      _
    %p188 = scmp.le.s32.totalorder 1, %s12
    %p189 = scmp.lt.s32.totalorder %s12, 3
    %p190 = pnand %p188, %p189
    %p191 = pneg %p190
    // Predicated region
    $region37: #{nn2_forward.1} parent=5 // pred_check
      _
    $region38: #{nn2_forward.1} parent=5 // pred_check_branch
      %193 = sbr.rel (%p190) target = $region40
    $region39: #{nn2_forward.1} parent=5 // pred_region
      %s194 = ssub.s32 %s12, 1
      %s195 = smul.u32 32, %s17
      %p196 = scmp.lt.s32.totalorder %s195, 63
      %s197 = scalar_select %p196, %s195, 63
      %s198 = smul.addr %s197, 8
      %s199 = scalar_lea.vmem %s0, %s198
      %p200 = pneg %p38
      %p201 = pneg %p35
      %p202 = pneg %p59
      %p203 = pneg %p56
      %p204 = pneg %p80
      %p205 = pneg %p77
      %p206 = pneg %p101
      %p207 = pneg %p98
      %p208 = pneg %p122
      %p209 = pneg %p119
      %p210 = pneg %p148
      %p211 = pneg %p145
      %s212 = smul.u32 2, %s17
      %p213 = scmp.lt.s32.totalorder %s212, 3
      %s214 = scalar_select %p213, %s212, 3
      %s215 = scalar_lea.vmem %s5, %s214
      %s216 = smul.u32 32, %s17
      %p217 = scmp.lt.s32.totalorder %s216, 63
      %s218 = scalar_select %p217, %s216, 63
      %s219 = smul.addr %s218, 8
      %s220 = scalar_lea.vmem %s0, %s219
      %s221 = smul.u32 32, %s17
      %s222 = smul.u32 2, %s17
      %p223 = scmp.lt.s32.totalorder %s222, 3
      %s224 = scalar_select %p223, %s222, 3
      %s225 = scalar_lea.vmem %s5, %s224
      %s226 = smul.u32 2, %s17
      %v227 = vld [vmem:[%s220] sm:$0xff]
      %v228 = vld [vmem:[%s220 + $0x8] sm:$0xff]
      %v229 = vld [vmem:[%s220 + $0x10] sm:$0xff]
      %v230 = vld [vmem:[%s220 + $0x18] sm:$0xff]
      %v231 = vld [vmem:[%s220 + $0x20] sm:$0xff]
      %v232 = vld [vmem:[%s220 + $0x28] sm:$0xff]
      %v233 = vld [vmem:[%s220 + $0x30] sm:$0xff]
      %v234 = vld [vmem:[%s220 + $0x38] sm:$0xff]
      %v235 = vld [vmem:[%s220 + $0x40] sm:$0xff]
      %v236 = vld [vmem:[%s220 + $0x48] sm:$0xff]
      %v237 = vld [vmem:[%s220 + $0x50] sm:$0xff]
      %v238 = vld [vmem:[%s220 + $0x58] sm:$0xff]
      %v239 = vld [vmem:[%s220 + $0x60] sm:$0xff]
      %v240 = vld [vmem:[%s220 + $0x68] sm:$0xff]
      %v241 = vld [vmem:[%s220 + $0x70] sm:$0xff]
      %v242 = vld [vmem:[%s220 + $0x78] sm:$0xff]
      %v243 = vld [vmem:[%s220 + $0x80] sm:$0xff]
      %v244 = vld [vmem:[%s220 + $0x88] sm:$0xff]
      %v245 = vld [vmem:[%s220 + $0x90] sm:$0xff]
      %v246 = vld [vmem:[%s220 + $0x98] sm:$0xff]
      %v247 = vld [vmem:[%s220 + $0xa0] sm:$0xff]
      %v248 = vld [vmem:[%s220 + $0xa8] sm:$0xff]
      %v249 = vld [vmem:[%s220 + $0xb0] sm:$0xff]
      %v250 = vld [vmem:[%s220 + $0xb8] sm:$0xff]
      %v251 = vld [vmem:[%s220 + $0xc0] sm:$0xff]
      %v252 = vld [vmem:[%s220 + $0xc8] sm:$0xff]
      %v253 = vld [vmem:[%s220 + $0xd0] sm:$0xff]
      %v254 = vld [vmem:[%s220 + $0xd8] sm:$0xff]
      %v255 = vld [vmem:[%s220 + $0xe0] sm:$0xff]
      %v256 = vld [vmem:[%s220 + $0xe8] sm:$0xff]
      %v257 = vld [vmem:[%s220 + $0xf0] sm:$0xff]
      %v258 = vld [vmem:[%s220 + $0xf8] sm:$0xff]
      %v259 = vld [vmem:[%s1] sm:$0xff]
      %v260 = vld [vmem:[%s1 + $0x8] sm:$0xff]
      %v261 = vld [vmem:[%s1 + $0x10] sm:$0xff]
      %v262 = vld [vmem:[%s1 + $0x18] sm:$0xff]
      %v263 = vld [vmem:[%s2] sm:$0xff]
      %v264 = vld [vmem:[%s2 + $0x8] sm:$0xff]
      %v265 = vld [vmem:[%s2 + $0x10] sm:$0xff]
      %v266 = vld [vmem:[%s2 + $0x18] sm:$0xff]
      %268 = vset.pattern.permute.xlu0 0
      %269 = vperm.xlu0 %268, %v263
      %v270 = vpop.permute.xlu0 %269
      %273 = vset.pattern.permute.xlu0 0
      %274 = vperm.xlu0 %273, %v264
      %v275 = vpop.permute.xlu0 %274
      %278 = vset.pattern.permute.xlu0 0
      %279 = vperm.xlu0 %278, %v265
      %v280 = vpop.permute.xlu0 %279
      %283 = vset.pattern.permute.xlu0 0
      %284 = vperm.xlu0 %283, %v266
      %v285 = vpop.permute.xlu0 %284
      %vm287 = vcmask 130048
      %v289 = vsel %vm287, %v259, 0
      %v292 = vsel %vm287, %v260, 0
      %v295 = vsel %vm287, %v261, 0
      %v298 = vsel %vm287, %v262, 0
      %v301 = vsel %vm287, %v227, 0
      %v304 = vsel %vm287, %v228, 0
      %v307 = vsel %vm287, %v229, 0
      %v310 = vsel %vm287, %v230, 0
      %v313 = vsel %vm287, %v231, 0
      %v316 = vsel %vm287, %v232, 0
      %v319 = vsel %vm287, %v233, 0
      %v322 = vsel %vm287, %v234, 0
      %v325 = vsel %vm287, %v235, 0
      %v328 = vsel %vm287, %v236, 0
      %v331 = vsel %vm287, %v237, 0
      %v334 = vsel %vm287, %v238, 0
      %v337 = vsel %vm287, %v239, 0
      %v340 = vsel %vm287, %v240, 0
      %v343 = vsel %vm287, %v241, 0
      %v346 = vsel %vm287, %v242, 0
      %v349 = vsel %vm287, %v243, 0
      %v352 = vsel %vm287, %v244, 0
      %v355 = vsel %vm287, %v245, 0
      %v358 = vsel %vm287, %v246, 0
      %v361 = vsel %vm287, %v247, 0
      %v364 = vsel %vm287, %v248, 0
      %v367 = vsel %vm287, %v249, 0
      %v370 = vsel %vm287, %v250, 0
      %v373 = vsel %vm287, %v251, 0
      %v376 = vsel %vm287, %v252, 0
      %v379 = vsel %vm287, %v253, 0
      %v382 = vsel %vm287, %v254, 0
      %v385 = vsel %vm287, %v255, 0
      %v388 = vsel %vm287, %v256, 0
      %v391 = vsel %vm287, %v257, 0
      %v394 = vsel %vm287, %v258, 0
      %396 = vmatprep.subr.mxu0 0.0
      %397 = vmatpush1.xpose.msra.mxu0 %v301
      %398 = vmatprep.subr.mxu0 0.0
      %399 = vmatpush1.xpose.msra.mxu0 %v304
      %400 = vmatprep.subr.mxu0 0.0
      %401 = vmatpush1.xpose.msra.mxu0 %v307
      %402 = vmatprep.subr.mxu0 0.0
      %403 = vmatpush1.xpose.msra.mxu0 %v310
      %404 = vmatprep.subr.mxu0 0.0
      %405 = vmatpush1.xpose.msra.mxu0 %v313
      %406 = vmatprep.subr.mxu0 0.0
      %407 = vmatpush1.xpose.msra.mxu0 %v316
      %408 = vmatprep.subr.mxu0 0.0
      %409 = vmatpush1.xpose.msra.mxu0 %v319
      %410 = vmatprep.subr.mxu0 0.0
      %411 = vmatpush1.xpose.msra.mxu0 %v322
      %412 = vmatprep.subr.mxu0 0.0
      %413 = vmatpush1.xpose.msra.mxu0 %v325
      %414 = vmatprep.subr.mxu0 0.0
      %415 = vmatpush1.xpose.msra.mxu0 %v328
      %416 = vmatprep.subr.mxu0 0.0
      %417 = vmatpush1.xpose.msra.mxu0 %v331
      %418 = vmatprep.subr.mxu0 0.0
      %419 = vmatpush1.xpose.msra.mxu0 %v334
      %420 = vmatprep.subr.mxu0 0.0
      %421 = vmatpush1.xpose.msra.mxu0 %v337
      %422 = vmatprep.subr.mxu0 0.0
      %423 = vmatpush1.xpose.msra.mxu0 %v340
      %424 = vmatprep.subr.mxu0 0.0
      %425 = vmatpush1.xpose.msra.mxu0 %v343
      %426 = vmatprep.subr.mxu0 0.0
      %427 = vmatpush1.xpose.msra.mxu0 %v346
      %428 = vmatprep.subr.mxu0 0.0
      %429 = vmatpush1.xpose.msra.mxu0 %v349
      %430 = vmatprep.subr.mxu0 0.0
      %431 = vmatpush1.xpose.msra.mxu0 %v352
      %432 = vmatprep.subr.mxu0 0.0
      %433 = vmatpush1.xpose.msra.mxu0 %v355
      %434 = vmatprep.subr.mxu0 0.0
      %435 = vmatpush1.xpose.msra.mxu0 %v358
      %436 = vmatprep.subr.mxu0 0.0
      %437 = vmatpush1.xpose.msra.mxu0 %v361
      %438 = vmatprep.subr.mxu0 0.0
      %439 = vmatpush1.xpose.msra.mxu0 %v364
      %440 = vmatprep.subr.mxu0 0.0
      %441 = vmatpush1.xpose.msra.mxu0 %v367
      %442 = vmatprep.subr.mxu0 0.0
      %443 = vmatpush1.xpose.msra.mxu0 %v370
      %444 = vmatprep.subr.mxu0 0.0
      %445 = vmatpush1.xpose.msra.mxu0 %v373
      %446 = vmatprep.subr.mxu0 0.0
      %447 = vmatpush1.xpose.msra.mxu0 %v376
      %448 = vmatprep.subr.mxu0 0.0
      %449 = vmatpush1.xpose.msra.mxu0 %v379
      %450 = vmatprep.subr.mxu0 0.0
      %451 = vmatpush1.xpose.msra.mxu0 %v382
      %452 = vmatprep.subr.mxu0 0.0
      %453 = vmatpush1.xpose.msra.mxu0 %v385
      %454 = vmatprep.subr.mxu0 0.0
      %455 = vmatpush1.xpose.msra.mxu0 %v388
      %456 = vmatprep.subr.mxu0 0.0
      %457 = vmatpush1.xpose.msra.mxu0 %v391
      %458 = vmatprep.subr.mxu0 0.0
      %459 = vmatpush1.xpose.msra.mxu0 %v394
      %460 = vmatprep.mubr.f32.mxu0 0.0
      %461 = vmatmul.mubr.f32.gmra.mrb[0].mxu0 %v289
      %v462 = vpop.f32.mrb[0].mxu0
      %v463 = vadd.f32 %v270, %v462
      %v464 = vpop.f32.mrb[0].mxu0
      %v465 = vadd.f32 %v270, %v464
      %466 = vmatprep.mubr.f32.mxu0 0.0
      %467 = vmatmul.mubr.f32.gmra.mrb[0].mxu0 %v292
      %v468 = vpop.f32.mrb[0].mxu0
      %v469 = vadd.f32 %v275, %v468
      %v470 = vpop.f32.mrb[0].mxu0
      %v471 = vadd.f32 %v275, %v470
      %472 = vmatprep.mubr.f32.mxu0 0.0
      %473 = vmatmul.mubr.f32.gmra.mrb[0].mxu0 %v295
      %v474 = vpop.f32.mrb[0].mxu0
      %v475 = vadd.f32 %v280, %v474
      %v476 = vpop.f32.mrb[0].mxu0
      %v477 = vadd.f32 %v280, %v476
      %478 = vmatprep.mubr.f32.mxu0 0.0
      %479 = vmatmul.mubr.f32.gmra.mrb[0].mxu0 %v298
      %v480 = vpop.f32.mrb[0].mxu0
      %v481 = vadd.f32 %v285, %v480
      %v482 = vpop.f32.mrb[0].mxu0
      %v483 = vadd.f32 %v285, %v482
      %484 = vdwg.mxu0
      %vm485 = vcmp.ge.f32.partialorder %v463, 0.0
      %vm486 = vcmp.ge.f32.partialorder %v465, 0.0
      %vm487 = vcmp.ge.f32.partialorder %v469, 0.0
      %vm488 = vcmp.ge.f32.partialorder %v471, 0.0
      %vm489 = vcmp.ge.f32.partialorder %v475, 0.0
      %vm490 = vcmp.ge.f32.partialorder %v477, 0.0
      %vm491 = vcmp.ge.f32.partialorder %v481, 0.0
      %vm492 = vcmp.ge.f32.partialorder %v483, 0.0
      %v493 = vmul.f32 %v463, 0.01
      %v494 = vmul.f32 %v465, 0.01
      %v495 = vmul.f32 %v469, 0.01
      %v496 = vmul.f32 %v471, 0.01
      %v497 = vmul.f32 %v475, 0.01
      %v498 = vmul.f32 %v477, 0.01
      %v499 = vmul.f32 %v481, 0.01
      %v500 = vmul.f32 %v483, 0.01
      %v501 = vsel %vm485, %v463, %v493
      %v502 = vsel %vm486, %v465, %v494
      %v503 = vsel %vm487, %v469, %v495
      %v504 = vsel %vm488, %v471, %v496
      %v505 = vsel %vm489, %v475, %v497
      %v506 = vsel %vm490, %v477, %v498
      %v507 = vsel %vm491, %v481, %v499
      %v508 = vsel %vm492, %v483, %v500
      %v509 = vld [vmem:[%s3] sm:$0xff]
      %v510 = vld [vmem:[%s3 + $0x8] sm:$0xff]
      %v511 = vld [vmem:[%s3 + $0x10] sm:$0xff]
      %v512 = vld [vmem:[%s3 + $0x18] sm:$0xff]
      %514 = vset.pattern.permute.xlu0 0
      %515 = vperm.xlu0 %514, %v509
      %v516 = vpop.permute.xlu0 %515
      %519 = vset.pattern.permute.xlu0 0
      %520 = vperm.xlu0 %519, %v510
      %v521 = vpop.permute.xlu0 %520
      %524 = vset.pattern.permute.xlu0 0
      %525 = vperm.xlu0 %524, %v511
      %v526 = vpop.permute.xlu0 %525
      %529 = vset.pattern.permute.xlu0 0
      %530 = vperm.xlu0 %529, %v512
      %v531 = vpop.permute.xlu0 %530
      %v533 = vmul.f32 %v501, %v516
      %v534 = vmul.f32 %v502, %v516
      %v535 = vmul.f32 %v503, %v521
      %v536 = vmul.f32 %v504, %v521
      %v537 = vmul.f32 %v505, %v526
      %v538 = vmul.f32 %v506, %v526
      %v539 = vmul.f32 %v507, %v531
      %v540 = vmul.f32 %v508, %v531
      %v541 = vadd.f32 %v533, %v535
      %v542 = vadd.f32 %v541, %v537
      %v543 = vadd.f32 %v542, %v539
      %v544 = vrot.slane %v543, 4
      %v545 = vadd.f32 %v543, %v544
      %v546 = vrot.slane %v545, 2
      %v547 = vadd.f32 %v545, %v546
      %v548 = vrot.slane %v547, 1
      %v549 = vadd.f32 %v547, %v548
      %v550 = vadd.f32 %v534, %v536
      %v551 = vadd.f32 %v550, %v538
      %v552 = vadd.f32 %v551, %v540
      %v553 = vrot.slane %v552, 4
      %v554 = vadd.f32 %v552, %v553
      %v555 = vrot.slane %v554, 2
      %v556 = vadd.f32 %v554, %v555
      %v557 = vrot.slane %v556, 1
      %v558 = vadd.f32 %v556, %v557
      %s559 = sld [smem:[#allocation2]]
      %v560 = vstv %s559
      %v561 = vadd.f32 %v549, %v560
      %v562 = vadd.f32 %v558, %v560
      %v563 = vsub.f32 0.0, %v561
      %v564 = vsub.f32 0.0, %v562
      %v565 = vmul.f32 %v563, 1.442695
      %v566 = vpow.pop %v565
      %v567 = vmul.f32 %v564, 1.442695
      %v568 = vpow.pop %v567
      %v569 = vadd.f32 %v566, 1.0
      %v570 = vadd.f32 %v568, 1.0
      %v571 = vrcp.pop %v569
      %v572 = vmul.f32 1.0, %v571
      %v573 = vrcp.pop %v570
      %v574 = vmul.f32 1.0, %v573
      %v577 = vcombine.low %v572, %v574
      %v579 = vunpack.c.l.s4 1966171168
      %v580 = vunpack.c.0.s8 %v579
      %v581 = vlaneseq
      %v582 = vshrl.u32 %v581, 7
      %v583 = vsub.s32 %v580, %v582
      %v584 = vrot.slane %v577, %v583
      %v586 = vunpack.c.l.s4 1966171168
      %v587 = vunpack.c.0.s8 %v586
      %v588 = vlaneseq
      %v589 = vshrl.u32 %v588, 7
      %v590 = vsub.s32 %v587, %v589
      %v591 = vrot.slane %v584, %v590
      %v593 = vlaneseq
      %vm594 = vcmp.ge.s32.totalorder %v593, 0
      %vm595 = vcmp.lt.s32.totalorder %v593, 256
      %vm596 = vmand %vm594, %vm595
      %597 = vst.msk [vmem:[%s225] sm:$0x3] %vm596, %v591
      %s598 = smul.u32 2, %s17
      %p599 = scmp.lt.s32.totalorder %s598, 3
      %s600 = scalar_select %p599, %s598, 3
      %s601 = scalar_lea.vmem %s5, %s600
      // Predicated region
      $region41: #{nn2_forward.1} parent=39 // pred_check
        %p602 = pneg %p145
      $region42: #{nn2_forward.1} parent=39 // pred_check_branch
        %604 = sbr.rel (%p602) target = $region44
      $region43: #{nn2_forward.1} parent=39 // pred_region
        %s605 = smul.u32 2, %s17
      $region44: #{nn2_forward.1} parent=39 // pred_fallthru
        _
    $region40: #{nn2_forward.1} parent=5 // pred_fallthru
      _
    %p606 = scmp.le.s32.totalorder 2, %s12
    // Predicated region
    $region45: #{nn2_forward.1} parent=5 // pred_check
      %p607 = pneg %p606
    $region46: #{nn2_forward.1} parent=5 // pred_check_branch
      %609 = sbr.rel (%p607) target = $region48
    $region47: #{nn2_forward.1} parent=5 // pred_region
      %s610 = ssub.s32 %s12, 2
      // Predicated region
      $region49: #{nn2_forward.1} parent=47 // pred_check
        %p611 = pneg %p151
      $region50: #{nn2_forward.1} parent=47 // pred_check_branch
        %613 = sbr.rel (%p611) target = $region52
      $region51: #{nn2_forward.1} parent=47 // pred_region
        %s614 = smul.u32 2, %s18
        %p615 = scmp.lt.s32.totalorder %s614, 3
        %s616 = scalar_select %p615, %s614, 3
        %s617 = scalar_lea.vmem %s5, %s616
      $region52: #{nn2_forward.1} parent=47 // pred_fallthru
        _
    $region48: #{nn2_forward.1} parent=5 // pred_fallthru
      _
  $region6: #{nn2_forward.1} parent=0 // loop_footer
    %s16 = sadd.s32 1, %s12
  $region7: #{nn2_forward.1} parent=0 // loop_footer_branch
    %11 = sbr.rel target = $region3
  $region8: #{nn2_forward.1} parent=0 // loop_exit
    _

</llo_original>
